<compile_context>
chip_gen: v5e
topology: v5e:2x2
jax: 0.10.0
libtpu: 0.0.40
codegen_flags: <defaults>
</compile_context>

<pallas_src>
import jax
import jax.numpy as jnp
import numpy as np
from jax.experimental import pallas as pl
from jax.experimental.pallas import tpu as pltpu


# ----------------------------------------------------------------------------
# Pallas kernel: fused 3-layer MLP (matmuls + LeakyReLU + sigmoid)
# ----------------------------------------------------------------------------
def _discriminator_kernel(x_ref, w1_ref, b1_ref, w2_ref, b2_ref, w3_ref, b3_ref,
                          o_ref):
    # x tile arrives as f32; cast to bf16 on-chip right before the MXU.
    x = x_ref[...].astype(jnp.bfloat16)                           # (TB, Dp)

    # Linear(D, 512) + LeakyReLU(0.2)   (f32 accumulation on the MXU)
    h1 = jnp.dot(x, w1_ref[...], preferred_element_type=jnp.float32) + b1_ref[...]
    h1 = jnp.maximum(h1, 0.2 * h1)                                # exact LeakyReLU(0.2)

    # Linear(512, 256) + LeakyReLU(0.2)
    h2 = jnp.dot(h1.astype(jnp.bfloat16), w2_ref[...],
                 preferred_element_type=jnp.float32) + b2_ref[...]
    h2 = jnp.maximum(h2, 0.2 * h2)

    # Linear(256, 1) + Sigmoid — on the MXU via the zero-padded (256,128)
    # weight; real logit lives in lane 0, other lanes are bias-only garbage
    # that never leaves the kernel (only the first o_ref.shape[-1] lanes are
    # stored and the wrapper keeps column 0).
    logit = jnp.dot(h2.astype(jnp.bfloat16), w3_ref[...],
                    preferred_element_type=jnp.float32) + b3_ref[...]  # (TB, 128)
    o_ref[...] = jax.nn.sigmoid(logit[:, : o_ref.shape[-1]])          # (TB, 8) f32


def _round_up(n, m):
    return ((n + m - 1) // m) * m


def _choose_tb(B):
    """Batch tile: multiple of 8; >=2 grid steps for B>=129 (v7x megacore)."""
    if B <= 128:
        return _round_up(max(B, 8), 8)
    if B <= 512:
        return 128
    return 256


OUT_LANES = 8  # lane-width of the stored output slab (column 0 is the result)


@jax.jit
def discriminator_forward(x_img, kp):
    """x_img: (B, C, H, W) float32; kp: kernel-ready params from prepare_params."""
    B = x_img.shape[0]
    x = x_img.reshape(B, -1)                                      # torch flatten(1)
    D = x.shape[1]
    Dp = kp["w1t"].shape[0]                                       # D padded to 128

    TB = _choose_tb(B)
    Bp = _round_up(B, TB)
    if Bp != B or Dp != D:
        # Only triggers for ragged batch / lane-ragged D; zero rows/cols are
        # inert (zero weight rows) and sliced off below.
        x = jnp.pad(x, ((0, Bp - B), (0, Dp - D)))
    grid = (Bp // TB,)

    flops = 2 * Bp * (Dp * 512 + 512 * 256 + 256 * 128)
    bytes_accessed = (Bp * Dp * 4                                  # x, f32
                      + (kp["w1t"].size + kp["w2t"].size + kp["w3p"].size) * 2
                      + (kp["b1"].size + kp["b2"].size + kp["b3"].size) * 4
                      + Bp * OUT_LANES * 4)                        # output slab

    out_padded = pl.pallas_call(
        _discriminator_kernel,
        out_shape=jax.ShapeDtypeStruct((Bp, OUT_LANES), jnp.float32),
        grid=grid,
        in_specs=[
            pl.BlockSpec((TB, Dp), lambda i: (i, 0)),             # x tile (pipelined, f32)
            pl.BlockSpec((Dp, 512), lambda i: (0, 0)),            # w1t  (resident, bf16)
            pl.BlockSpec((1, 512), lambda i: (0, 0)),             # b1   (resident, f32)
            pl.BlockSpec((512, 256), lambda i: (0, 0)),           # w2t  (resident, bf16)
            pl.BlockSpec((1, 256), lambda i: (0, 0)),             # b2   (resident, f32)
            pl.BlockSpec((256, 128), lambda i: (0, 0)),           # w3 padded (resident, bf16)
            pl.BlockSpec((1, 128), lambda i: (0, 0)),             # b3 row (resident, f32)
        ],
        out_specs=pl.BlockSpec((TB, OUT_LANES), lambda i: (i, 0)),
        compiler_params=pltpu.CompilerParams(
            dimension_semantics=("parallel",),
            vmem_limit_bytes=48 * 1024 * 1024),
        cost_estimate=pl.CostEstimate(
            flops=flops, transcendentals=Bp * OUT_LANES,
            bytes_accessed=bytes_accessed),
    )(x, kp["w1t"], kp["b1"], kp["w2t"], kp["b2"], kp["w3p"], kp["b3"])

    return out_padded[:B, :1]                                     # (B, 1) f32


# ----------------------------------------------------------------------------
# Parameters: torch-style init (nn.Linear default U(-k, k), k = 1/sqrt(fan_in))
# plus a one-time prep into kernel layout (transposed, bf16, padded).
# ----------------------------------------------------------------------------
def init_params(key, in_features):
    dims = [(in_features, 512), (512, 256), (256, 1)]
    params = {}
    for idx, (fan_in, fan_out) in enumerate(dims, start=1):
        key, kw, kb = jax.random.split(key, 3)
        bound = 1.0 / np.sqrt(fan_in)
        params[f"w{idx}"] = jax.random.uniform(kw, (fan_out, fan_in),
                                               jnp.float32, -bound, bound)
        params[f"b{idx}"] = jax.random.uniform(kb, (fan_out,),
                                               jnp.float32, -bound, bound)
    return params


def prepare_params(params):
    """One-time conversion to the kernel's layout (done outside the hot path)."""
    D = params["w1"].shape[1]
    Dp = _round_up(D, 128)
    w1t = jnp.transpose(params["w1"]).astype(jnp.bfloat16)        # (D, 512)
    if Dp != D:
        w1t = jnp.pad(w1t, ((0, Dp - D), (0, 0)))                 # zero K-rows
    w2t = jnp.transpose(params["w2"]).astype(jnp.bfloat16)        # (512, 256)
    w3t = jnp.transpose(params["w3"]).astype(jnp.bfloat16)        # (256, 1)
    w3p = jnp.pad(w3t, ((0, 0), (0, 128 - w3t.shape[1])))         # (256, 128), lane 0 real
    return {
        "w1t": w1t,
        "b1": params["b1"].reshape(1, -1).astype(jnp.float32),    # (1, 512)
        "w2t": w2t,
        "b2": params["b2"].reshape(1, -1).astype(jnp.float32),    # (1, 256)
        "w3p": w3p,
        "b3": jnp.broadcast_to(params["b3"].reshape(1, 1),
                               (1, 128)).astype(jnp.float32),     # (1, 128)
    }


def reference_forward(x_img, params):
    """Pure-JAX f32 reference (torch-layout params) to validate the kernel."""
    x = x_img.reshape(x_img.shape[0], -1)
    h = x @ params["w1"].T + params["b1"]
    h = jnp.where(h > 0, h, 0.2 * h)
    h = h @ params["w2"].T + params["b2"]
    h = jnp.where(h > 0, h, 0.2 * h)
    h = h @ params["w3"].T + params["b3"]
    return jax.nn.sigmoid(h)


if __name__ == "__main__":
    key = jax.random.PRNGKey(0)

    # Small image shape consistent with the module: img_shape = (1, 16, 16)
    B, C, H, W = 2, 1, 16, 16
    in_features = C * H * W                       # 256

    key, kx, kp_key = jax.random.split(key, 3)
    x_img = jax.random.normal(kx, (B, C, H, W), dtype=jnp.float32)
    params = init_params(kp_key, in_features)
    kparams = prepare_params(params)

    out = discriminator_forward(x_img, kparams)
    out = jax.block_until_ready(out)

    ref = reference_forward(x_img, params)
    # bf16 MXU inputs (f32 accumulation) -> loosened tolerance vs f32 reference.
    np.testing.assert_allclose(np.asarray(out), np.asarray(ref),
                               rtol=2e-2, atol=2e-2)
    assert out.shape == (B, 1)
    print("KERNEL_OK")
</pallas_src>

<mosaic_0001>
module attributes {stable_mosaic.version = 11 : i64} {
  func.func @_discriminator_kernel(%arg0: i32, %arg1: memref<8x256xf32, #tpu.memory_space<vmem>>, %arg2: memref<256x512xbf16, #tpu.memory_space<vmem>>, %arg3: memref<1x512xf32, #tpu.memory_space<vmem>>, %arg4: memref<512x256xbf16, #tpu.memory_space<vmem>>, %arg5: memref<1x256xf32, #tpu.memory_space<vmem>>, %arg6: memref<256x128xbf16, #tpu.memory_space<vmem>>, %arg7: memref<1x128xf32, #tpu.memory_space<vmem>>, %arg8: memref<8x8xf32, #tpu.memory_space<vmem>>) attributes {dimension_semantics = [#tpu.dimension_semantics<parallel>], iteration_bounds = array<i64: 1>, scalar_prefetch = 0 : i64, scratch_operands = 0 : i64, tpu.core_type = #tpu.core_type<tc>, window_params = [{transform_indices = @transform_0, window_bounds = array<i64: 8, 256>}, {pipeline_mode = #tpu.pipeline_mode<synchronous>, transform_indices = @transform_1, window_bounds = array<i64: 256, 512>}, {pipeline_mode = #tpu.pipeline_mode<synchronous>, transform_indices = @transform_2, window_bounds = array<i64: 1, 512>}, {pipeline_mode = #tpu.pipeline_mode<synchronous>, transform_indices = @transform_3, window_bounds = array<i64: 512, 256>}, {pipeline_mode = #tpu.pipeline_mode<synchronous>, transform_indices = @transform_4, window_bounds = array<i64: 1, 256>}, {pipeline_mode = #tpu.pipeline_mode<synchronous>, transform_indices = @transform_5, window_bounds = array<i64: 256, 128>}, {pipeline_mode = #tpu.pipeline_mode<synchronous>, transform_indices = @transform_6, window_bounds = array<i64: 1, 128>}, {transform_indices = @transform_7, window_bounds = array<i64: 8, 8>}]} {
    %c0 = arith.constant 0 : index
    %c0_0 = arith.constant 0 : index
    %0 = vector.load %arg1[%c0, %c0_0] : memref<8x256xf32, #tpu.memory_space<vmem>>, vector<8x256xf32>
    %1 = arith.truncf %0 : vector<8x256xf32> to vector<8x256xbf16>
    %c0_1 = arith.constant 0 : index
    %c0_2 = arith.constant 0 : index
    %2 = vector.load %arg2[%c0_1, %c0_2] : memref<256x512xbf16, #tpu.memory_space<vmem>>, vector<256x512xbf16>
    %cst = arith.constant dense<0.000000e+00> : vector<8x512xf32>
    %3 = tpu.matmul %1, %2, %cst {dimension_numbers = #tpu.dot_dimension_numbers<[1], [0], [0], [1], [0, 0, 1, 1], [], []>} : vector<8x256xbf16>, vector<256x512xbf16>, vector<8x512xf32> -> vector<8x512xf32>
    %c0_3 = arith.constant 0 : index
    %c0_4 = arith.constant 0 : index
    %4 = vector.load %arg3[%c0_3, %c0_4] : memref<1x512xf32, #tpu.memory_space<vmem>>, vector<1x512xf32>
    %5 = vector.broadcast %4 : vector<1x512xf32> to vector<8x512xf32>
    %6 = arith.addf %3, %5 : vector<8x512xf32>
    %cst_5 = arith.constant 2.000000e-01 : f32
    %7 = vector.broadcast %cst_5 : f32 to vector<8x512xf32>
    %8 = arith.mulf %7, %6 : vector<8x512xf32>
    %9 = arith.maximumf %6, %8 : vector<8x512xf32>
    %10 = arith.truncf %9 : vector<8x512xf32> to vector<8x512xbf16>
    %c0_6 = arith.constant 0 : index
    %c0_7 = arith.constant 0 : index
    %11 = vector.load %arg4[%c0_6, %c0_7] : memref<512x256xbf16, #tpu.memory_space<vmem>>, vector<512x256xbf16>
    %cst_8 = arith.constant dense<0.000000e+00> : vector<8x256xf32>
    %12 = tpu.matmul %10, %11, %cst_8 {dimension_numbers = #tpu.dot_dimension_numbers<[1], [0], [0], [1], [0, 0, 1, 1], [], []>} : vector<8x512xbf16>, vector<512x256xbf16>, vector<8x256xf32> -> vector<8x256xf32>
    %c0_9 = arith.constant 0 : index
    %c0_10 = arith.constant 0 : index
    %13 = vector.load %arg5[%c0_9, %c0_10] : memref<1x256xf32, #tpu.memory_space<vmem>>, vector<1x256xf32>
    %14 = vector.broadcast %13 : vector<1x256xf32> to vector<8x256xf32>
    %15 = arith.addf %12, %14 : vector<8x256xf32>
    %cst_11 = arith.constant 2.000000e-01 : f32
    %16 = vector.broadcast %cst_11 : f32 to vector<8x256xf32>
    %17 = arith.mulf %16, %15 : vector<8x256xf32>
    %18 = arith.maximumf %15, %17 : vector<8x256xf32>
    %19 = arith.truncf %18 : vector<8x256xf32> to vector<8x256xbf16>
    %c0_12 = arith.constant 0 : index
    %c0_13 = arith.constant 0 : index
    %20 = vector.load %arg6[%c0_12, %c0_13] : memref<256x128xbf16, #tpu.memory_space<vmem>>, vector<256x128xbf16>
    %cst_14 = arith.constant dense<0.000000e+00> : vector<8x128xf32>
    %21 = tpu.matmul %19, %20, %cst_14 {dimension_numbers = #tpu.dot_dimension_numbers<[1], [0], [0], [1], [0, 0, 1, 1], [], []>} : vector<8x256xbf16>, vector<256x128xbf16>, vector<8x128xf32> -> vector<8x128xf32>
    %c0_15 = arith.constant 0 : index
    %c0_16 = arith.constant 0 : index
    %22 = vector.load %arg7[%c0_15, %c0_16] : memref<1x128xf32, #tpu.memory_space<vmem>>, vector<1x128xf32>
    %23 = vector.broadcast %22 : vector<1x128xf32> to vector<8x128xf32>
    %24 = arith.addf %21, %23 : vector<8x128xf32>
    %25 = vector.extract_strided_slice %24 {offsets = [0, 0], sizes = [8, 8], strides = [1, 1]} : vector<8x128xf32> to vector<8x8xf32>
    %26 = arith.negf %25 : vector<8x8xf32>
    %27 = math.exp %26 : vector<8x8xf32>
    %cst_17 = arith.constant 1.000000e+00 : f32
    %28 = vector.broadcast %cst_17 : f32 to vector<8x8xf32>
    %29 = arith.addf %28, %27 : vector<8x8xf32>
    %30 = arith.divf %28, %29 : vector<8x8xf32>
    %c0_18 = arith.constant 0 : index
    %c0_19 = arith.constant 0 : index
    %31 = vector.load %arg8[%c0_18, %c0_19] : memref<8x8xf32, #tpu.memory_space<vmem>>, vector<8x8xf32>
    tpu.vector_store %arg8[%c0_18, %c0_19], %30 {strides = array<i32>} : memref<8x8xf32, #tpu.memory_space<vmem>>, vector<8x8xf32>,
    return
  }
  func.func @transform_0(%arg0: i32) -> (i32, i32) {
    %c0_i32 = arith.constant 0 : i32
    %c0_i32_0 = arith.constant 0 : i32
    return %arg0, %c0_i32 : i32, i32
  }
  func.func @transform_1(%arg0: i32) -> (i32, i32) {
    %c0_i32 = arith.constant 0 : i32
    %c0_i32_0 = arith.constant 0 : i32
    %c0_i32_1 = arith.constant 0 : i32
    return %c0_i32, %c0_i32_0 : i32, i32
  }
  func.func @transform_2(%arg0: i32) -> (i32, i32) {
    %c0_i32 = arith.constant 0 : i32
    %c0_i32_0 = arith.constant 0 : i32
    %c0_i32_1 = arith.constant 0 : i32
    return %c0_i32, %c0_i32_0 : i32, i32
  }
  func.func @transform_3(%arg0: i32) -> (i32, i32) {
    %c0_i32 = arith.constant 0 : i32
    %c0_i32_0 = arith.constant 0 : i32
    %c0_i32_1 = arith.constant 0 : i32
    return %c0_i32, %c0_i32_0 : i32, i32
  }
  func.func @transform_4(%arg0: i32) -> (i32, i32) {
    %c0_i32 = arith.constant 0 : i32
    %c0_i32_0 = arith.constant 0 : i32
    %c0_i32_1 = arith.constant 0 : i32
    return %c0_i32, %c0_i32_0 : i32, i32
  }
  func.func @transform_5(%arg0: i32) -> (i32, i32) {
    %c0_i32 = arith.constant 0 : i32
    %c0_i32_0 = arith.constant 0 : i32
    %c0_i32_1 = arith.constant 0 : i32
    return %c0_i32, %c0_i32_0 : i32, i32
  }
  func.func @transform_6(%arg0: i32) -> (i32, i32) {
    %c0_i32 = arith.constant 0 : i32
    %c0_i32_0 = arith.constant 0 : i32
    %c0_i32_1 = arith.constant 0 : i32
    return %c0_i32, %c0_i32_0 : i32, i32
  }
  func.func @transform_7(%arg0: i32) -> (i32, i32) {
    %c0_i32 = arith.constant 0 : i32
    %c0_i32_0 = arith.constant 0 : i32
    return %arg0, %c0_i32 : i32, i32
  }
}

</mosaic_0001>

<llo_original>
// kernel: discriminator_forward.1
$region0: #{discriminator_forward.1}
  #allocation0 [shape = 'u32[]', space=smem, size = 0x4, offset = 0x4, fixed_abs, tag = 'smem constant byte address 0x4 - core index']
  #allocation1 [shape = 'u32[72,128]{1,0:T(1,128)}', space=vmem, size = 0x9000, scoped, tag = 'internal scratch']
  %s0 = inlined_call_operand.vmem [shape: f32[8,256], index: 0, kind: input, shape index: {}]
  %s1 = inlined_call_operand.hbm [shape: bf16[256,512], index: 1, kind: input, shape index: {}]
  %s2 = inlined_call_operand.vmem [shape: f32[1,512], index: 2, kind: input, shape index: {}]
  %s3 = inlined_call_operand.hbm [shape: bf16[512,256], index: 3, kind: input, shape index: {}]
  %s4 = inlined_call_operand.vmem [shape: f32[1,256], index: 4, kind: input, shape index: {}]
  %s5 = inlined_call_operand.hbm [shape: bf16[256,128], index: 5, kind: input, shape index: {}]
  %s6 = inlined_call_operand.vmem [shape: f32[1,128], index: 6, kind: input, shape index: {}]
  %s7 = inlined_call_operand.vmem [shape: f32[8,8], index: 7, kind: output, shape index: {}]
  %s8 = sld [smem:[#allocation0]]
  $region50: #{discriminator_forward.1} parent=0
    _
  %s10 = ssub.s32 1, %s8
  %s11 = scalar_select 0, %s10, %s8
  $region1: #{discriminator_forward.1} parent=0
    #allocation2 [shape = 'u8[262144]{0}', space=vmem, size = 0x40000, scoped, tag = 'input window, operand 1, single buffered']
    #allocation3 [shape = 's32[1]{0}', space=sflag, size = 0x4, scoped, tag = 'scoped memory for discriminator_forward.1']
    #allocation4 [shape = 'u8[262144]{0}', space=vmem, size = 0x40000, scoped, tag = 'input window, operand 3, single buffered']
    #allocation5 [shape = 's32[1]{0}', space=sflag, size = 0x4, scoped, tag = 'scoped memory for discriminator_forward.1']
    #allocation6 [shape = 'u8[65536]{0}', space=vmem, size = 0x10000, scoped, tag = 'input window, operand 5, single buffered']
    %12 = vsyncpa [#allocation3], 0
    %13 = vsyncpa [#allocation5], 0
    // Predicated region
    $region2: #{discriminator_forward.1} parent=1 // pred_check
      _
    $region3: #{discriminator_forward.1} parent=1 // pred_check_branch
      %15 = sbr.rel (0) target = $region5
    $region4: #{discriminator_forward.1} parent=1 // pred_region
      _
    $region5: #{discriminator_forward.1} parent=1 // pred_fallthru
      _
    // Predicated region
    $region6: #{discriminator_forward.1} parent=1 // pred_check
      _
    $region7: #{discriminator_forward.1} parent=1 // pred_check_branch
      %17 = sbr.rel (0) target = $region9
    $region8: #{discriminator_forward.1} parent=1 // pred_region
      %19 = vsyncadd [#allocation3], 0
      %s20 = sshll.u32 %s1, 4
      %s21 = int_to_ptr.hbm [resolvable:$true] %s20
      %s22 = sshll.u32 [#allocation2], 4
      %s23 = int_to_ptr.vmem [resolvable:$true] %s22
      %28 = dma.hbm_to_vmem [thread:$0]  %s21, 8192, %s23, [#allocation3], 256, 256, 16
    $region9: #{discriminator_forward.1} parent=1 // pred_fallthru
      _
    // Predicated region
    $region10: #{discriminator_forward.1} parent=1 // pred_check
      _
    $region11: #{discriminator_forward.1} parent=1 // pred_check_branch
      %30 = sbr.rel (0) target = $region13
    $region12: #{discriminator_forward.1} parent=1 // pred_region
      _
    $region13: #{discriminator_forward.1} parent=1 // pred_fallthru
      _
    // Predicated region
    $region14: #{discriminator_forward.1} parent=1 // pred_check
      _
    $region15: #{discriminator_forward.1} parent=1 // pred_check_branch
      %32 = sbr.rel (0) target = $region17
    $region16: #{discriminator_forward.1} parent=1 // pred_region
      %34 = vsyncadd [#allocation5], 0
      %s35 = sshll.u32 %s3, 4
      %s36 = int_to_ptr.hbm [resolvable:$true] %s35
      %s37 = sshll.u32 [#allocation4], 4
      %s38 = int_to_ptr.vmem [resolvable:$true] %s37
      %43 = dma.hbm_to_vmem [thread:$0]  %s36, 8192, %s38, [#allocation5], 128, 128, 8
    $region17: #{discriminator_forward.1} parent=1 // pred_fallthru
      _
    // Predicated region
    $region18: #{discriminator_forward.1} parent=1 // pred_check
      _
    $region19: #{discriminator_forward.1} parent=1 // pred_check_branch
      %45 = sbr.rel (0) target = $region21
    $region20: #{discriminator_forward.1} parent=1 // pred_region
      _
    $region21: #{discriminator_forward.1} parent=1 // pred_fallthru
      _
    // Predicated region
    $region22: #{discriminator_forward.1} parent=1 // pred_check
      _
    $region23: #{discriminator_forward.1} parent=1 // pred_check_branch
      %47 = sbr.rel (0) target = $region25
    $region24: #{discriminator_forward.1} parent=1 // pred_region
      %49 = vsyncadd [#allocation5], 0
      %s50 = sshll.u32 %s5, 4
      %s51 = int_to_ptr.hbm [resolvable:$true] %s50
      %s52 = sshll.u32 [#allocation6], 4
      %s53 = int_to_ptr.vmem [resolvable:$true] %s52
      %58 = dma.hbm_to_vmem [thread:$0]  %s51, 2048, %s53, [#allocation5], 64, 64, 4
    $region25: #{discriminator_forward.1} parent=1 // pred_fallthru
      _
    // Predicated region
    $region26: #{discriminator_forward.1} parent=1 // pred_check
      _
    $region27: #{discriminator_forward.1} parent=1 // pred_check_branch
      %60 = sbr.rel (0) target = $region29
    $region28: #{discriminator_forward.1} parent=1 // pred_region
      _
    $region29: #{discriminator_forward.1} parent=1 // pred_fallthru
      _
    // Predicated region
    $region30: #{discriminator_forward.1} parent=1 // pred_check
      _
    $region31: #{discriminator_forward.1} parent=1 // pred_check_branch
      %62 = sbr.rel (0) target = $region33
    $region32: #{discriminator_forward.1} parent=1 // pred_region
      %64 = dma.done [#allocation3], 8192
    $region33: #{discriminator_forward.1} parent=1 // pred_fallthru
      _
    // Predicated region
    $region34: #{discriminator_forward.1} parent=1 // pred_check
      _
    $region35: #{discriminator_forward.1} parent=1 // pred_check_branch
      %66 = sbr.rel (0) target = $region37
    $region36: #{discriminator_forward.1} parent=1 // pred_region
      %68 = dma.done [#allocation5], 8192
    $region37: #{discriminator_forward.1} parent=1 // pred_fallthru
      _
    // Predicated region
    $region38: #{discriminator_forward.1} parent=1 // pred_check
      _
    $region39: #{discriminator_forward.1} parent=1 // pred_check_branch
      %70 = sbr.rel (0) target = $region41
    $region40: #{discriminator_forward.1} parent=1 // pred_region
      %72 = dma.done [#allocation5], 2048
    $region41: #{discriminator_forward.1} parent=1 // pred_fallthru
      _
    %v73 = vld [vmem:[%s0] sm:$0xff]
    %v74 = vld [vmem:[%s0 + $0x8] sm:$0xff]
    %v75 = vpack.c.bf16 %v73, %v73
    %v76 = vpack.c.bf16 %v74, %v74
    %v77 = vld [vmem:[#allocation2] sm:$0xff]
    %v78 = vld [vmem:[#allocation2 + $0x8] sm:$0xff]
    %v79 = vld [vmem:[#allocation2 + $0x10] sm:$0xff]
    %v80 = vld [vmem:[#allocation2 + $0x18] sm:$0xff]
    %v81 = vld [vmem:[#allocation2 + $0x20] sm:$0xff]
    %v82 = vld [vmem:[#allocation2 + $0x28] sm:$0xff]
    %v83 = vld [vmem:[#allocation2 + $0x30] sm:$0xff]
    %v84 = vld [vmem:[#allocation2 + $0x38] sm:$0xff]
    %v85 = vld [vmem:[#allocation2 + $0x40] sm:$0xff]
    %v86 = vld [vmem:[#allocation2 + $0x48] sm:$0xff]
    %v87 = vld [vmem:[#allocation2 + $0x50] sm:$0xff]
    %v88 = vld [vmem:[#allocation2 + $0x58] sm:$0xff]
    %v89 = vld [vmem:[#allocation2 + $0x60] sm:$0xff]
    %v90 = vld [vmem:[#allocation2 + $0x68] sm:$0xff]
    %v91 = vld [vmem:[#allocation2 + $0x70] sm:$0xff]
    %v92 = vld [vmem:[#allocation2 + $0x78] sm:$0xff]
    %v93 = vld [vmem:[#allocation2 + $0x80] sm:$0xff]
    %v94 = vld [vmem:[#allocation2 + $0x88] sm:$0xff]
    %v95 = vld [vmem:[#allocation2 + $0x90] sm:$0xff]
    %v96 = vld [vmem:[#allocation2 + $0x98] sm:$0xff]
    %v97 = vld [vmem:[#allocation2 + $0xa0] sm:$0xff]
    %v98 = vld [vmem:[#allocation2 + $0xa8] sm:$0xff]
    %v99 = vld [vmem:[#allocation2 + $0xb0] sm:$0xff]
    %v100 = vld [vmem:[#allocation2 + $0xb8] sm:$0xff]
    %v101 = vld [vmem:[#allocation2 + $0xc0] sm:$0xff]
    %v102 = vld [vmem:[#allocation2 + $0xc8] sm:$0xff]
    %v103 = vld [vmem:[#allocation2 + $0xd0] sm:$0xff]
    %v104 = vld [vmem:[#allocation2 + $0xd8] sm:$0xff]
    %v105 = vld [vmem:[#allocation2 + $0xe0] sm:$0xff]
    %v106 = vld [vmem:[#allocation2 + $0xe8] sm:$0xff]
    %v107 = vld [vmem:[#allocation2 + $0xf0] sm:$0xff]
    %v108 = vld [vmem:[#allocation2 + $0xf8] sm:$0xff]
    %v109 = vld [vmem:[#allocation2 + $0x100] sm:$0xff]
    %v110 = vld [vmem:[#allocation2 + $0x108] sm:$0xff]
    %v111 = vld [vmem:[#allocation2 + $0x110] sm:$0xff]
    %v112 = vld [vmem:[#allocation2 + $0x118] sm:$0xff]
    %v113 = vld [vmem:[#allocation2 + $0x120] sm:$0xff]
    %v114 = vld [vmem:[#allocation2 + $0x128] sm:$0xff]
    %v115 = vld [vmem:[#allocation2 + $0x130] sm:$0xff]
    %v116 = vld [vmem:[#allocation2 + $0x138] sm:$0xff]
    %v117 = vld [vmem:[#allocation2 + $0x140] sm:$0xff]
    %v118 = vld [vmem:[#allocation2 + $0x148] sm:$0xff]
    %v119 = vld [vmem:[#allocation2 + $0x150] sm:$0xff]
    %v120 = vld [vmem:[#allocation2 + $0x158] sm:$0xff]
    %v121 = vld [vmem:[#allocation2 + $0x160] sm:$0xff]
    %v122 = vld [vmem:[#allocation2 + $0x168] sm:$0xff]
    %v123 = vld [vmem:[#allocation2 + $0x170] sm:$0xff]
    %v124 = vld [vmem:[#allocation2 + $0x178] sm:$0xff]
    %v125 = vld [vmem:[#allocation2 + $0x180] sm:$0xff]
    %v126 = vld [vmem:[#allocation2 + $0x188] sm:$0xff]
    %v127 = vld [vmem:[#allocation2 + $0x190] sm:$0xff]
    %v128 = vld [vmem:[#allocation2 + $0x198] sm:$0xff]
    %v129 = vld [vmem:[#allocation2 + $0x1a0] sm:$0xff]
    %v130 = vld [vmem:[#allocation2 + $0x1a8] sm:$0xff]
    %v131 = vld [vmem:[#allocation2 + $0x1b0] sm:$0xff]
    %v132 = vld [vmem:[#allocation2 + $0x1b8] sm:$0xff]
    %v133 = vld [vmem:[#allocation2 + $0x1c0] sm:$0xff]
    %v134 = vld [vmem:[#allocation2 + $0x1c8] sm:$0xff]
    %v135 = vld [vmem:[#allocation2 + $0x1d0] sm:$0xff]
    %v136 = vld [vmem:[#allocation2 + $0x1d8] sm:$0xff]
    %v137 = vld [vmem:[#allocation2 + $0x1e0] sm:$0xff]
    %v138 = vld [vmem:[#allocation2 + $0x1e8] sm:$0xff]
    %v139 = vld [vmem:[#allocation2 + $0x1f0] sm:$0xff]
    %v140 = vld [vmem:[#allocation2 + $0x1f8] sm:$0xff]
    %v141 = vld [vmem:[%s2] sm:$0xf]
    %v143 = vperm.slane %v141, 0
    %v144 = vperm.slane %v141, 1
    %v145 = vperm.slane %v141, 2
    %v146 = vperm.slane %v141, 3
    %v215 = vunpack.c.l.b16 %v77
    %v216 = vunpack.c.h.b16 %v77
    %v217 = vunpack.c.l.b16 %v78
    %v218 = vunpack.c.h.b16 %v78
    %v219 = vunpack.c.l.b16 %v79
    %v220 = vunpack.c.h.b16 %v79
    %v221 = vunpack.c.l.b16 %v80
    %v222 = vunpack.c.h.b16 %v80
    %v223 = vunpack.c.l.b16 %v81
    %v224 = vunpack.c.h.b16 %v81
    %v225 = vunpack.c.l.b16 %v82
    %v226 = vunpack.c.h.b16 %v82
    %v227 = vunpack.c.l.b16 %v83
    %v228 = vunpack.c.h.b16 %v83
    %v229 = vunpack.c.l.b16 %v84
    %v230 = vunpack.c.h.b16 %v84
    %v231 = vunpack.c.l.b16 %v85
    %v232 = vunpack.c.h.b16 %v85
    %v233 = vunpack.c.l.b16 %v86
    %v234 = vunpack.c.h.b16 %v86
    %v235 = vunpack.c.l.b16 %v87
    %v236 = vunpack.c.h.b16 %v87
    %v237 = vunpack.c.l.b16 %v88
    %v238 = vunpack.c.h.b16 %v88
    %v239 = vunpack.c.l.b16 %v89
    %v240 = vunpack.c.h.b16 %v89
    %v241 = vunpack.c.l.b16 %v90
    %v242 = vunpack.c.h.b16 %v90
    %v243 = vunpack.c.l.b16 %v91
    %v244 = vunpack.c.h.b16 %v91
    %v245 = vunpack.c.l.b16 %v92
    %v246 = vunpack.c.h.b16 %v92
    %v247 = vunpack.c.l.b16 %v93
    %v248 = vunpack.c.h.b16 %v93
    %v249 = vunpack.c.l.b16 %v94
    %v250 = vunpack.c.h.b16 %v94
    %v251 = vunpack.c.l.b16 %v95
    %v252 = vunpack.c.h.b16 %v95
    %v253 = vunpack.c.l.b16 %v96
    %v254 = vunpack.c.h.b16 %v96
    %v255 = vunpack.c.l.b16 %v97
    %v256 = vunpack.c.h.b16 %v97
    %v257 = vunpack.c.l.b16 %v98
    %v258 = vunpack.c.h.b16 %v98
    %v259 = vunpack.c.l.b16 %v99
    %v260 = vunpack.c.h.b16 %v99
    %v261 = vunpack.c.l.b16 %v100
    %v262 = vunpack.c.h.b16 %v100
    %v263 = vunpack.c.l.b16 %v101
    %v264 = vunpack.c.h.b16 %v101
    %v265 = vunpack.c.l.b16 %v102
    %v266 = vunpack.c.h.b16 %v102
    %v267 = vunpack.c.l.b16 %v103
    %v268 = vunpack.c.h.b16 %v103
    %v269 = vunpack.c.l.b16 %v104
    %v270 = vunpack.c.h.b16 %v104
    %v271 = vunpack.c.l.b16 %v105
    %v272 = vunpack.c.h.b16 %v105
    %v273 = vunpack.c.l.b16 %v106
    %v274 = vunpack.c.h.b16 %v106
    %v275 = vunpack.c.l.b16 %v107
    %v276 = vunpack.c.h.b16 %v107
    %v277 = vunpack.c.l.b16 %v108
    %v278 = vunpack.c.h.b16 %v108
    %v279 = vunpack.c.l.b16 %v109
    %v280 = vunpack.c.h.b16 %v109
    %v281 = vunpack.c.l.b16 %v110
    %v282 = vunpack.c.h.b16 %v110
    %v283 = vunpack.c.l.b16 %v111
    %v284 = vunpack.c.h.b16 %v111
    %v285 = vunpack.c.l.b16 %v112
    %v286 = vunpack.c.h.b16 %v112
    %v287 = vunpack.c.l.b16 %v113
    %v288 = vunpack.c.h.b16 %v113
    %v289 = vunpack.c.l.b16 %v114
    %v290 = vunpack.c.h.b16 %v114
    %v291 = vunpack.c.l.b16 %v115
    %v292 = vunpack.c.h.b16 %v115
    %v293 = vunpack.c.l.b16 %v116
    %v294 = vunpack.c.h.b16 %v116
    %v295 = vunpack.c.l.b16 %v117
    %v296 = vunpack.c.h.b16 %v117
    %v297 = vunpack.c.l.b16 %v118
    %v298 = vunpack.c.h.b16 %v118
    %v299 = vunpack.c.l.b16 %v119
    %v300 = vunpack.c.h.b16 %v119
    %v301 = vunpack.c.l.b16 %v120
    %v302 = vunpack.c.h.b16 %v120
    %v303 = vunpack.c.l.b16 %v121
    %v304 = vunpack.c.h.b16 %v121
    %v305 = vunpack.c.l.b16 %v122
    %v306 = vunpack.c.h.b16 %v122
    %v307 = vunpack.c.l.b16 %v123
    %v308 = vunpack.c.h.b16 %v123
    %v309 = vunpack.c.l.b16 %v124
    %v310 = vunpack.c.h.b16 %v124
    %v311 = vunpack.c.l.b16 %v125
    %v312 = vunpack.c.h.b16 %v125
    %v313 = vunpack.c.l.b16 %v126
    %v314 = vunpack.c.h.b16 %v126
    %v315 = vunpack.c.l.b16 %v127
    %v316 = vunpack.c.h.b16 %v127
    %v317 = vunpack.c.l.b16 %v128
    %v318 = vunpack.c.h.b16 %v128
    %v319 = vunpack.c.l.b16 %v129
    %v320 = vunpack.c.h.b16 %v129
    %v321 = vunpack.c.l.b16 %v130
    %v322 = vunpack.c.h.b16 %v130
    %v323 = vunpack.c.l.b16 %v131
    %v324 = vunpack.c.h.b16 %v131
    %v325 = vunpack.c.l.b16 %v132
    %v326 = vunpack.c.h.b16 %v132
    %v327 = vunpack.c.l.b16 %v133
    %v328 = vunpack.c.h.b16 %v133
    %v329 = vunpack.c.l.b16 %v134
    %v330 = vunpack.c.h.b16 %v134
    %v331 = vunpack.c.l.b16 %v135
    %v332 = vunpack.c.h.b16 %v135
    %v333 = vunpack.c.l.b16 %v136
    %v334 = vunpack.c.h.b16 %v136
    %v335 = vunpack.c.l.b16 %v137
    %v336 = vunpack.c.h.b16 %v137
    %v337 = vunpack.c.l.b16 %v138
    %v338 = vunpack.c.h.b16 %v138
    %v339 = vunpack.c.l.b16 %v139
    %v340 = vunpack.c.h.b16 %v139
    %v341 = vunpack.c.l.b16 %v140
    %v342 = vunpack.c.h.b16 %v140
    %v343 = vpack.c.b16 %v219, %v215
    %v344 = vpack.c.b16 %v220, %v216
    %v345 = vpack.c.b16 %v221, %v217
    %v346 = vpack.c.b16 %v222, %v218
    %v347 = vpack.c.b16 %v227, %v223
    %v348 = vpack.c.b16 %v228, %v224
    %v349 = vpack.c.b16 %v229, %v225
    %v350 = vpack.c.b16 %v230, %v226
    %v351 = vpack.c.b16 %v235, %v231
    %v352 = vpack.c.b16 %v236, %v232
    %v353 = vpack.c.b16 %v237, %v233
    %v354 = vpack.c.b16 %v238, %v234
    %v355 = vpack.c.b16 %v243, %v239
    %v356 = vpack.c.b16 %v244, %v240
    %v357 = vpack.c.b16 %v245, %v241
    %v358 = vpack.c.b16 %v246, %v242
    %v359 = vpack.c.b16 %v251, %v247
    %v360 = vpack.c.b16 %v252, %v248
    %v361 = vpack.c.b16 %v253, %v249
    %v362 = vpack.c.b16 %v254, %v250
    %v363 = vpack.c.b16 %v259, %v255
    %v364 = vpack.c.b16 %v260, %v256
    %v365 = vpack.c.b16 %v261, %v257
    %v366 = vpack.c.b16 %v262, %v258
    %v367 = vpack.c.b16 %v267, %v263
    %v368 = vpack.c.b16 %v268, %v264
    %v369 = vpack.c.b16 %v269, %v265
    %v370 = vpack.c.b16 %v270, %v266
    %v371 = vpack.c.b16 %v275, %v271
    %v372 = vpack.c.b16 %v276, %v272
    %v373 = vpack.c.b16 %v277, %v273
    %v374 = vpack.c.b16 %v278, %v274
    %v375 = vpack.c.b16 %v283, %v279
    %v376 = vpack.c.b16 %v284, %v280
    %v377 = vpack.c.b16 %v285, %v281
    %v378 = vpack.c.b16 %v286, %v282
    %v379 = vpack.c.b16 %v291, %v287
    %v380 = vpack.c.b16 %v292, %v288
    %v381 = vpack.c.b16 %v293, %v289
    %v382 = vpack.c.b16 %v294, %v290
    %v383 = vpack.c.b16 %v299, %v295
    %v384 = vpack.c.b16 %v300, %v296
    %v385 = vpack.c.b16 %v301, %v297
    %v386 = vpack.c.b16 %v302, %v298
    %v387 = vpack.c.b16 %v307, %v303
    %v388 = vpack.c.b16 %v308, %v304
    %v389 = vpack.c.b16 %v309, %v305
    %v390 = vpack.c.b16 %v310, %v306
    %v391 = vpack.c.b16 %v315, %v311
    %v392 = vpack.c.b16 %v316, %v312
    %v393 = vpack.c.b16 %v317, %v313
    %v394 = vpack.c.b16 %v318, %v314
    %v395 = vpack.c.b16 %v323, %v319
    %v396 = vpack.c.b16 %v324, %v320
    %v397 = vpack.c.b16 %v325, %v321
    %v398 = vpack.c.b16 %v326, %v322
    %v399 = vpack.c.b16 %v331, %v327
    %v400 = vpack.c.b16 %v332, %v328
    %v401 = vpack.c.b16 %v333, %v329
    %v402 = vpack.c.b16 %v334, %v330
    %v403 = vpack.c.b16 %v339, %v335
    %v404 = vpack.c.b16 %v340, %v336
    %v405 = vpack.c.b16 %v341, %v337
    %v406 = vpack.c.b16 %v342, %v338
    %471 = vmatpush.bf16.msra.mxu0 %v371
    %472 = vmatpush.bf16.msra.mxu0 %v367
    %473 = vmatpush.bf16.msra.mxu0 %v363
    %474 = vmatpush.bf16.msra.mxu0 %v359
    %475 = vmatpush.bf16.msra.mxu0 %v355
    %476 = vmatpush.bf16.msra.mxu0 %v351
    %477 = vmatpush.bf16.msra.mxu0 %v347
    %478 = vmatpush.bf16.msra.mxu0 %v343
    %479 = vmatmul.bf16.gmra.mxu0 %v75
    %v480 = vpop.f32.mrf.mxu0
    %v481 = vadd.f32 %v143, %v480
    %v482 = vpop.f32.mrf.mxu0
    %483 = vdwg.mxu0
    %484 = vmatpush.bf16.msra.mxu0 %v403
    %485 = vmatpush.bf16.msra.mxu0 %v399
    %486 = vmatpush.bf16.msra.mxu0 %v395
    %487 = vmatpush.bf16.msra.mxu0 %v391
    %488 = vmatpush.bf16.msra.mxu0 %v387
    %489 = vmatpush.bf16.msra.mxu0 %v383
    %490 = vmatpush.bf16.msra.mxu0 %v379
    %491 = vmatpush.bf16.msra.mxu0 %v375
    %492 = vmatmul.bf16.gmra.mxu0 %v76
    %v493 = vpop.f32.mrf.mxu0
    %v494 = vadd.f32 %v481, %v493
    %v495 = vpop.f32.mrf.mxu0
    %496 = vdwg.mxu0
    %497 = vmatpush.bf16.msra.mxu0 %v372
    %498 = vmatpush.bf16.msra.mxu0 %v368
    %499 = vmatpush.bf16.msra.mxu0 %v364
    %500 = vmatpush.bf16.msra.mxu0 %v360
    %501 = vmatpush.bf16.msra.mxu0 %v356
    %502 = vmatpush.bf16.msra.mxu0 %v352
    %503 = vmatpush.bf16.msra.mxu0 %v348
    %504 = vmatpush.bf16.msra.mxu0 %v344
    %505 = vmatmul.bf16.gmra.mxu0 %v75
    %v506 = vpop.f32.mrf.mxu0
    %v507 = vadd.f32 %v144, %v506
    %v508 = vpop.f32.mrf.mxu0
    %509 = vdwg.mxu0
    %510 = vmatpush.bf16.msra.mxu0 %v404
    %511 = vmatpush.bf16.msra.mxu0 %v400
    %512 = vmatpush.bf16.msra.mxu0 %v396
    %513 = vmatpush.bf16.msra.mxu0 %v392
    %514 = vmatpush.bf16.msra.mxu0 %v388
    %515 = vmatpush.bf16.msra.mxu0 %v384
    %516 = vmatpush.bf16.msra.mxu0 %v380
    %517 = vmatpush.bf16.msra.mxu0 %v376
    %518 = vmatmul.bf16.gmra.mxu0 %v76
    %v519 = vpop.f32.mrf.mxu0
    %v520 = vadd.f32 %v507, %v519
    %v521 = vpop.f32.mrf.mxu0
    %522 = vdwg.mxu0
    %523 = vmatpush.bf16.msra.mxu0 %v373
    %524 = vmatpush.bf16.msra.mxu0 %v369
    %525 = vmatpush.bf16.msra.mxu0 %v365
    %526 = vmatpush.bf16.msra.mxu0 %v361
    %527 = vmatpush.bf16.msra.mxu0 %v357
    %528 = vmatpush.bf16.msra.mxu0 %v353
    %529 = vmatpush.bf16.msra.mxu0 %v349
    %530 = vmatpush.bf16.msra.mxu0 %v345
    %531 = vmatmul.bf16.gmra.mxu0 %v75
    %v532 = vpop.f32.mrf.mxu0
    %v533 = vadd.f32 %v145, %v532
    %v534 = vpop.f32.mrf.mxu0
    %535 = vdwg.mxu0
    %536 = vmatpush.bf16.msra.mxu0 %v405
    %537 = vmatpush.bf16.msra.mxu0 %v401
    %538 = vmatpush.bf16.msra.mxu0 %v397
    %539 = vmatpush.bf16.msra.mxu0 %v393
    %540 = vmatpush.bf16.msra.mxu0 %v389
    %541 = vmatpush.bf16.msra.mxu0 %v385
    %542 = vmatpush.bf16.msra.mxu0 %v381
    %543 = vmatpush.bf16.msra.mxu0 %v377
    %544 = vmatmul.bf16.gmra.mxu0 %v76
    %v545 = vpop.f32.mrf.mxu0
    %v546 = vadd.f32 %v533, %v545
    %v547 = vpop.f32.mrf.mxu0
    %548 = vdwg.mxu0
    %549 = vmatpush.bf16.msra.mxu0 %v374
    %550 = vmatpush.bf16.msra.mxu0 %v370
    %551 = vmatpush.bf16.msra.mxu0 %v366
    %552 = vmatpush.bf16.msra.mxu0 %v362
    %553 = vmatpush.bf16.msra.mxu0 %v358
    %554 = vmatpush.bf16.msra.mxu0 %v354
    %555 = vmatpush.bf16.msra.mxu0 %v350
    %556 = vmatpush.bf16.msra.mxu0 %v346
    %557 = vmatmul.bf16.gmra.mxu0 %v75
    %v558 = vpop.f32.mrf.mxu0
    %v559 = vadd.f32 %v146, %v558
    %v560 = vpop.f32.mrf.mxu0
    %561 = vdwg.mxu0
    %562 = vmatpush.bf16.msra.mxu0 %v406
    %563 = vmatpush.bf16.msra.mxu0 %v402
    %564 = vmatpush.bf16.msra.mxu0 %v398
    %565 = vmatpush.bf16.msra.mxu0 %v394
    %566 = vmatpush.bf16.msra.mxu0 %v390
    %567 = vmatpush.bf16.msra.mxu0 %v386
    %568 = vmatpush.bf16.msra.mxu0 %v382
    %569 = vmatpush.bf16.msra.mxu0 %v378
    %570 = vmatmul.bf16.gmra.mxu0 %v76
    %v571 = vpop.f32.mrf.mxu0
    %v572 = vadd.f32 %v559, %v571
    %v573 = vpop.f32.mrf.mxu0
    %574 = vdwg.mxu0
    %v575 = vmul.f32 %v494, 0.2
    %v576 = vmul.f32 %v520, 0.2
    %v577 = vmul.f32 %v546, 0.2
    %v578 = vmul.f32 %v572, 0.2
    %v579 = vmax.f32 %v494, %v575
    %v580 = vmax.f32 %v520, %v576
    %v581 = vmax.f32 %v546, %v577
    %v582 = vmax.f32 %v572, %v578
    %v583 = vpack.c.bf16 %v579, %v579
    %v584 = vpack.c.bf16 %v580, %v580
    %v585 = vpack.c.bf16 %v581, %v581
    %v586 = vpack.c.bf16 %v582, %v582
    %v587 = vld [vmem:[#allocation4] sm:$0xff]
    %v588 = vld [vmem:[#allocation4 + $0x8] sm:$0xff]
    %v589 = vld [vmem:[#allocation4 + $0x10] sm:$0xff]
    %v590 = vld [vmem:[#allocation4 + $0x18] sm:$0xff]
    %v591 = vld [vmem:[#allocation4 + $0x20] sm:$0xff]
    %v592 = vld [vmem:[#allocation4 + $0x28] sm:$0xff]
    %v593 = vld [vmem:[#allocation4 + $0x30] sm:$0xff]
    %v594 = vld [vmem:[#allocation4 + $0x38] sm:$0xff]
    %v595 = vld [vmem:[#allocation4 + $0x40] sm:$0xff]
    %v596 = vld [vmem:[#allocation4 + $0x48] sm:$0xff]
    %v597 = vld [vmem:[#allocation4 + $0x50] sm:$0xff]
    %v598 = vld [vmem:[#allocation4 + $0x58] sm:$0xff]
    %v599 = vld [vmem:[#allocation4 + $0x60] sm:$0xff]
    %v600 = vld [vmem:[#allocation4 + $0x68] sm:$0xff]
    %v601 = vld [vmem:[#allocation4 + $0x70] sm:$0xff]
    %v602 = vld [vmem:[#allocation4 + $0x78] sm:$0xff]
    %v603 = vld [vmem:[#allocation4 + $0x80] sm:$0xff]
    %v604 = vld [vmem:[#allocation4 + $0x88] sm:$0xff]
    %v605 = vld [vmem:[#allocation4 + $0x90] sm:$0xff]
    %v606 = vld [vmem:[#allocation4 + $0x98] sm:$0xff]
    %v607 = vld [vmem:[#allocation4 + $0xa0] sm:$0xff]
    %v608 = vld [vmem:[#allocation4 + $0xa8] sm:$0xff]
    %v609 = vld [vmem:[#allocation4 + $0xb0] sm:$0xff]
    %v610 = vld [vmem:[#allocation4 + $0xb8] sm:$0xff]
    %v611 = vld [vmem:[#allocation4 + $0xc0] sm:$0xff]
    %v612 = vld [vmem:[#allocation4 + $0xc8] sm:$0xff]
    %v613 = vld [vmem:[#allocation4 + $0xd0] sm:$0xff]
    %v614 = vld [vmem:[#allocation4 + $0xd8] sm:$0xff]
    %v615 = vld [vmem:[#allocation4 + $0xe0] sm:$0xff]
    %v616 = vld [vmem:[#allocation4 + $0xe8] sm:$0xff]
    %v617 = vld [vmem:[#allocation4 + $0xf0] sm:$0xff]
    %v618 = vld [vmem:[#allocation4 + $0xf8] sm:$0xff]
    %v619 = vld [vmem:[#allocation4 + $0x100] sm:$0xff]
    %v620 = vld [vmem:[#allocation4 + $0x108] sm:$0xff]
    %v621 = vld [vmem:[#allocation4 + $0x110] sm:$0xff]
    %v622 = vld [vmem:[#allocation4 + $0x118] sm:$0xff]
    %v623 = vld [vmem:[#allocation4 + $0x120] sm:$0xff]
    %v624 = vld [vmem:[#allocation4 + $0x128] sm:$0xff]
    %v625 = vld [vmem:[#allocation4 + $0x130] sm:$0xff]
    %v626 = vld [vmem:[#allocation4 + $0x138] sm:$0xff]
    %v627 = vld [vmem:[#allocation4 + $0x140] sm:$0xff]
    %v628 = vld [vmem:[#allocation4 + $0x148] sm:$0xff]
    %v629 = vld [vmem:[#allocation4 + $0x150] sm:$0xff]
    %v630 = vld [vmem:[#allocation4 + $0x158] sm:$0xff]
    %v631 = vld [vmem:[#allocation4 + $0x160] sm:$0xff]
    %v632 = vld [vmem:[#allocation4 + $0x168] sm:$0xff]
    %v633 = vld [vmem:[#allocation4 + $0x170] sm:$0xff]
    %v634 = vld [vmem:[#allocation4 + $0x178] sm:$0xff]
    %v635 = vld [vmem:[#allocation4 + $0x180] sm:$0xff]
    %v636 = vld [vmem:[#allocation4 + $0x188] sm:$0xff]
    %v637 = vld [vmem:[#allocation4 + $0x190] sm:$0xff]
    %v638 = vld [vmem:[#allocation4 + $0x198] sm:$0xff]
    %v639 = vld [vmem:[#allocation4 + $0x1a0] sm:$0xff]
    %v640 = vld [vmem:[#allocation4 + $0x1a8] sm:$0xff]
    %v641 = vld [vmem:[#allocation4 + $0x1b0] sm:$0xff]
    %v642 = vld [vmem:[#allocation4 + $0x1b8] sm:$0xff]
    %v643 = vld [vmem:[#allocation4 + $0x1c0] sm:$0xff]
    %v644 = vld [vmem:[#allocation4 + $0x1c8] sm:$0xff]
    %v645 = vld [vmem:[#allocation4 + $0x1d0] sm:$0xff]
    %v646 = vld [vmem:[#allocation4 + $0x1d8] sm:$0xff]
    %v647 = vld [vmem:[#allocation4 + $0x1e0] sm:$0xff]
    %v648 = vld [vmem:[#allocation4 + $0x1e8] sm:$0xff]
    %v649 = vld [vmem:[#allocation4 + $0x1f0] sm:$0xff]
    %v650 = vld [vmem:[#allocation4 + $0x1f8] sm:$0xff]
    %v651 = vld [vmem:[%s4] sm:$0x3]
    %v653 = vperm.slane %v651, 0
    %v654 = vperm.slane %v651, 1
    %v721 = vunpack.c.l.b16 %v587
    %v722 = vunpack.c.h.b16 %v587
    %v723 = vunpack.c.l.b16 %v588
    %v724 = vunpack.c.h.b16 %v588
    %v725 = vunpack.c.l.b16 %v589
    %v726 = vunpack.c.h.b16 %v589
    %v727 = vunpack.c.l.b16 %v590
    %v728 = vunpack.c.h.b16 %v590
    %v729 = vunpack.c.l.b16 %v591
    %v730 = vunpack.c.h.b16 %v591
    %v731 = vunpack.c.l.b16 %v592
    %v732 = vunpack.c.h.b16 %v592
    %v733 = vunpack.c.l.b16 %v593
    %v734 = vunpack.c.h.b16 %v593
    %v735 = vunpack.c.l.b16 %v594
    %v736 = vunpack.c.h.b16 %v594
    %v737 = vunpack.c.l.b16 %v595
    %v738 = vunpack.c.h.b16 %v595
    %v739 = vunpack.c.l.b16 %v596
    %v740 = vunpack.c.h.b16 %v596
    %v741 = vunpack.c.l.b16 %v597
    %v742 = vunpack.c.h.b16 %v597
    %v743 = vunpack.c.l.b16 %v598
    %v744 = vunpack.c.h.b16 %v598
    %v745 = vunpack.c.l.b16 %v599
    %v746 = vunpack.c.h.b16 %v599
    %v747 = vunpack.c.l.b16 %v600
    %v748 = vunpack.c.h.b16 %v600
    %v749 = vunpack.c.l.b16 %v601
    %v750 = vunpack.c.h.b16 %v601
    %v751 = vunpack.c.l.b16 %v602
    %v752 = vunpack.c.h.b16 %v602
    %v753 = vunpack.c.l.b16 %v603
    %v754 = vunpack.c.h.b16 %v603
    %v755 = vunpack.c.l.b16 %v604
    %v756 = vunpack.c.h.b16 %v604
    %v757 = vunpack.c.l.b16 %v605
    %v758 = vunpack.c.h.b16 %v605
    %v759 = vunpack.c.l.b16 %v606
    %v760 = vunpack.c.h.b16 %v606
    %v761 = vunpack.c.l.b16 %v607
    %v762 = vunpack.c.h.b16 %v607
    %v763 = vunpack.c.l.b16 %v608
    %v764 = vunpack.c.h.b16 %v608
    %v765 = vunpack.c.l.b16 %v609
    %v766 = vunpack.c.h.b16 %v609
    %v767 = vunpack.c.l.b16 %v610
    %v768 = vunpack.c.h.b16 %v610
    %v769 = vunpack.c.l.b16 %v611
    %v770 = vunpack.c.h.b16 %v611
    %v771 = vunpack.c.l.b16 %v612
    %v772 = vunpack.c.h.b16 %v612
    %v773 = vunpack.c.l.b16 %v613
    %v774 = vunpack.c.h.b16 %v613
    %v775 = vunpack.c.l.b16 %v614
    %v776 = vunpack.c.h.b16 %v614
    %v777 = vunpack.c.l.b16 %v615
    %v778 = vunpack.c.h.b16 %v615
    %v779 = vunpack.c.l.b16 %v616
    %v780 = vunpack.c.h.b16 %v616
    %v781 = vunpack.c.l.b16 %v617
    %v782 = vunpack.c.h.b16 %v617
    %v783 = vunpack.c.l.b16 %v618
    %v784 = vunpack.c.h.b16 %v618
    %v785 = vunpack.c.l.b16 %v619
    %v786 = vunpack.c.h.b16 %v619
    %v787 = vunpack.c.l.b16 %v620
    %v788 = vunpack.c.h.b16 %v620
    %v789 = vunpack.c.l.b16 %v621
    %v790 = vunpack.c.h.b16 %v621
    %v791 = vunpack.c.l.b16 %v622
    %v792 = vunpack.c.h.b16 %v622
    %v793 = vunpack.c.l.b16 %v623
    %v794 = vunpack.c.h.b16 %v623
    %v795 = vunpack.c.l.b16 %v624
    %v796 = vunpack.c.h.b16 %v624
    %v797 = vunpack.c.l.b16 %v625
    %v798 = vunpack.c.h.b16 %v625
    %v799 = vunpack.c.l.b16 %v626
    %v800 = vunpack.c.h.b16 %v626
    %v801 = vunpack.c.l.b16 %v627
    %v802 = vunpack.c.h.b16 %v627
    %v803 = vunpack.c.l.b16 %v628
    %v804 = vunpack.c.h.b16 %v628
    %v805 = vunpack.c.l.b16 %v629
    %v806 = vunpack.c.h.b16 %v629
    %v807 = vunpack.c.l.b16 %v630
    %v808 = vunpack.c.h.b16 %v630
    %v809 = vunpack.c.l.b16 %v631
    %v810 = vunpack.c.h.b16 %v631
    %v811 = vunpack.c.l.b16 %v632
    %v812 = vunpack.c.h.b16 %v632
    %v813 = vunpack.c.l.b16 %v633
    %v814 = vunpack.c.h.b16 %v633
    %v815 = vunpack.c.l.b16 %v634
    %v816 = vunpack.c.h.b16 %v634
    %v817 = vunpack.c.l.b16 %v635
    %v818 = vunpack.c.h.b16 %v635
    %v819 = vunpack.c.l.b16 %v636
    %v820 = vunpack.c.h.b16 %v636
    %v821 = vunpack.c.l.b16 %v637
    %v822 = vunpack.c.h.b16 %v637
    %v823 = vunpack.c.l.b16 %v638
    %v824 = vunpack.c.h.b16 %v638
    %v825 = vunpack.c.l.b16 %v639
    %v826 = vunpack.c.h.b16 %v639
    %v827 = vunpack.c.l.b16 %v640
    %v828 = vunpack.c.h.b16 %v640
    %v829 = vunpack.c.l.b16 %v641
    %v830 = vunpack.c.h.b16 %v641
    %v831 = vunpack.c.l.b16 %v642
    %v832 = vunpack.c.h.b16 %v642
    %v833 = vunpack.c.l.b16 %v643
    %v834 = vunpack.c.h.b16 %v643
    %v835 = vunpack.c.l.b16 %v644
    %v836 = vunpack.c.h.b16 %v644
    %v837 = vunpack.c.l.b16 %v645
    %v838 = vunpack.c.h.b16 %v645
    %v839 = vunpack.c.l.b16 %v646
    %v840 = vunpack.c.h.b16 %v646
    %v841 = vunpack.c.l.b16 %v647
    %v842 = vunpack.c.h.b16 %v647
    %v843 = vunpack.c.l.b16 %v648
    %v844 = vunpack.c.h.b16 %v648
    %v845 = vunpack.c.l.b16 %v649
    %v846 = vunpack.c.h.b16 %v649
    %v847 = vunpack.c.l.b16 %v650
    %v848 = vunpack.c.h.b16 %v650
    %v849 = vpack.c.b16 %v723, %v721
    %v850 = vpack.c.b16 %v724, %v722
    %v851 = vpack.c.b16 %v727, %v725
    %v852 = vpack.c.b16 %v728, %v726
    %v853 = vpack.c.b16 %v731, %v729
    %v854 = vpack.c.b16 %v732, %v730
    %v855 = vpack.c.b16 %v735, %v733
    %v856 = vpack.c.b16 %v736, %v734
    %v857 = vpack.c.b16 %v739, %v737
    %v858 = vpack.c.b16 %v740, %v738
    %v859 = vpack.c.b16 %v743, %v741
    %v860 = vpack.c.b16 %v744, %v742
    %v861 = vpack.c.b16 %v747, %v745
    %v862 = vpack.c.b16 %v748, %v746
    %v863 = vpack.c.b16 %v751, %v749
    %v864 = vpack.c.b16 %v752, %v750
    %v865 = vpack.c.b16 %v755, %v753
    %v866 = vpack.c.b16 %v756, %v754
    %v867 = vpack.c.b16 %v759, %v757
    %v868 = vpack.c.b16 %v760, %v758
    %v869 = vpack.c.b16 %v763, %v761
    %v870 = vpack.c.b16 %v764, %v762
    %v871 = vpack.c.b16 %v767, %v765
    %v872 = vpack.c.b16 %v768, %v766
    %v873 = vpack.c.b16 %v771, %v769
    %v874 = vpack.c.b16 %v772, %v770
    %v875 = vpack.c.b16 %v775, %v773
    %v876 = vpack.c.b16 %v776, %v774
    %v877 = vpack.c.b16 %v779, %v777
    %v878 = vpack.c.b16 %v780, %v778
    %v879 = vpack.c.b16 %v783, %v781
    %v880 = vpack.c.b16 %v784, %v782
    %v881 = vpack.c.b16 %v787, %v785
    %v882 = vpack.c.b16 %v788, %v786
    %v883 = vpack.c.b16 %v791, %v789
    %v884 = vpack.c.b16 %v792, %v790
    %v885 = vpack.c.b16 %v795, %v793
    %v886 = vpack.c.b16 %v796, %v794
    %v887 = vpack.c.b16 %v799, %v797
    %v888 = vpack.c.b16 %v800, %v798
    %v889 = vpack.c.b16 %v803, %v801
    %v890 = vpack.c.b16 %v804, %v802
    %v891 = vpack.c.b16 %v807, %v805
    %v892 = vpack.c.b16 %v808, %v806
    %v893 = vpack.c.b16 %v811, %v809
    %v894 = vpack.c.b16 %v812, %v810
    %v895 = vpack.c.b16 %v815, %v813
    %v896 = vpack.c.b16 %v816, %v814
    %v897 = vpack.c.b16 %v819, %v817
    %v898 = vpack.c.b16 %v820, %v818
    %v899 = vpack.c.b16 %v823, %v821
    %v900 = vpack.c.b16 %v824, %v822
    %v901 = vpack.c.b16 %v827, %v825
    %v902 = vpack.c.b16 %v828, %v826
    %v903 = vpack.c.b16 %v831, %v829
    %v904 = vpack.c.b16 %v832, %v830
    %v905 = vpack.c.b16 %v835, %v833
    %v906 = vpack.c.b16 %v836, %v834
    %v907 = vpack.c.b16 %v839, %v837
    %v908 = vpack.c.b16 %v840, %v838
    %v909 = vpack.c.b16 %v843, %v841
    %v910 = vpack.c.b16 %v844, %v842
    %v911 = vpack.c.b16 %v847, %v845
    %v912 = vpack.c.b16 %v848, %v846
    %977 = vmatpush.bf16.msra.mxu0 %v863
    %978 = vmatpush.bf16.msra.mxu0 %v861
    %979 = vmatpush.bf16.msra.mxu0 %v859
    %980 = vmatpush.bf16.msra.mxu0 %v857
    %981 = vmatpush.bf16.msra.mxu0 %v855
    %982 = vmatpush.bf16.msra.mxu0 %v853
    %983 = vmatpush.bf16.msra.mxu0 %v851
    %984 = vmatpush.bf16.msra.mxu0 %v849
    %985 = vmatmul.bf16.gmra.mxu0 %v583
    %v986 = vpop.f32.mrf.mxu0
    %v987 = vadd.f32 %v653, %v986
    %v988 = vpop.f32.mrf.mxu0
    %989 = vdwg.mxu0
    %990 = vmatpush.bf16.msra.mxu0 %v879
    %991 = vmatpush.bf16.msra.mxu0 %v877
    %992 = vmatpush.bf16.msra.mxu0 %v875
    %993 = vmatpush.bf16.msra.mxu0 %v873
    %994 = vmatpush.bf16.msra.mxu0 %v871
    %995 = vmatpush.bf16.msra.mxu0 %v869
    %996 = vmatpush.bf16.msra.mxu0 %v867
    %997 = vmatpush.bf16.msra.mxu0 %v865
    %998 = vmatmul.bf16.gmra.mxu0 %v584
    %v999 = vpop.f32.mrf.mxu0
    %v1000 = vadd.f32 %v987, %v999
    %v1001 = vpop.f32.mrf.mxu0
    %1002 = vdwg.mxu0
    %1003 = vmatpush.bf16.msra.mxu0 %v895
    %1004 = vmatpush.bf16.msra.mxu0 %v893
    %1005 = vmatpush.bf16.msra.mxu0 %v891
    %1006 = vmatpush.bf16.msra.mxu0 %v889
    %1007 = vmatpush.bf16.msra.mxu0 %v887
    %1008 = vmatpush.bf16.msra.mxu0 %v885
    %1009 = vmatpush.bf16.msra.mxu0 %v883
    %1010 = vmatpush.bf16.msra.mxu0 %v881
    %1011 = vmatmul.bf16.gmra.mxu0 %v585
    %v1012 = vpop.f32.mrf.mxu0
    %v1013 = vadd.f32 %v1000, %v1012
    %v1014 = vpop.f32.mrf.mxu0
    %1015 = vdwg.mxu0
    %1016 = vmatpush.bf16.msra.mxu0 %v911
    %1017 = vmatpush.bf16.msra.mxu0 %v909
    %1018 = vmatpush.bf16.msra.mxu0 %v907
    %1019 = vmatpush.bf16.msra.mxu0 %v905
    %1020 = vmatpush.bf16.msra.mxu0 %v903
    %1021 = vmatpush.bf16.msra.mxu0 %v901
    %1022 = vmatpush.bf16.msra.mxu0 %v899
    %1023 = vmatpush.bf16.msra.mxu0 %v897
    %1024 = vmatmul.bf16.gmra.mxu0 %v586
    %v1025 = vpop.f32.mrf.mxu0
    %v1026 = vadd.f32 %v1013, %v1025
    %v1027 = vpop.f32.mrf.mxu0
    %1028 = vdwg.mxu0
    %1029 = vmatpush.bf16.msra.mxu0 %v864
    %1030 = vmatpush.bf16.msra.mxu0 %v862
    %1031 = vmatpush.bf16.msra.mxu0 %v860
    %1032 = vmatpush.bf16.msra.mxu0 %v858
    %1033 = vmatpush.bf16.msra.mxu0 %v856
    %1034 = vmatpush.bf16.msra.mxu0 %v854
    %1035 = vmatpush.bf16.msra.mxu0 %v852
    %1036 = vmatpush.bf16.msra.mxu0 %v850
    %1037 = vmatmul.bf16.gmra.mxu0 %v583
    %v1038 = vpop.f32.mrf.mxu0
    %v1039 = vadd.f32 %v654, %v1038
    %v1040 = vpop.f32.mrf.mxu0
    %1041 = vdwg.mxu0
    %1042 = vmatpush.bf16.msra.mxu0 %v880
    %1043 = vmatpush.bf16.msra.mxu0 %v878
    %1044 = vmatpush.bf16.msra.mxu0 %v876
    %1045 = vmatpush.bf16.msra.mxu0 %v874
    %1046 = vmatpush.bf16.msra.mxu0 %v872
    %1047 = vmatpush.bf16.msra.mxu0 %v870
    %1048 = vmatpush.bf16.msra.mxu0 %v868
    %1049 = vmatpush.bf16.msra.mxu0 %v866
    %1050 = vmatmul.bf16.gmra.mxu0 %v584
    %v1051 = vpop.f32.mrf.mxu0
    %v1052 = vadd.f32 %v1039, %v1051
    %v1053 = vpop.f32.mrf.mxu0
    %1054 = vdwg.mxu0
    %1055 = vmatpush.bf16.msra.mxu0 %v896
    %1056 = vmatpush.bf16.msra.mxu0 %v894
    %1057 = vmatpush.bf16.msra.mxu0 %v892
    %1058 = vmatpush.bf16.msra.mxu0 %v890
    %1059 = vmatpush.bf16.msra.mxu0 %v888
    %1060 = vmatpush.bf16.msra.mxu0 %v886
    %1061 = vmatpush.bf16.msra.mxu0 %v884
    %1062 = vmatpush.bf16.msra.mxu0 %v882
    %1063 = vmatmul.bf16.gmra.mxu0 %v585
    %v1064 = vpop.f32.mrf.mxu0
    %v1065 = vadd.f32 %v1052, %v1064
    %v1066 = vpop.f32.mrf.mxu0
    %1067 = vdwg.mxu0
    %1068 = vmatpush.bf16.msra.mxu0 %v912
    %1069 = vmatpush.bf16.msra.mxu0 %v910
    %1070 = vmatpush.bf16.msra.mxu0 %v908
    %1071 = vmatpush.bf16.msra.mxu0 %v906
    %1072 = vmatpush.bf16.msra.mxu0 %v904
    %1073 = vmatpush.bf16.msra.mxu0 %v902
    %1074 = vmatpush.bf16.msra.mxu0 %v900
    %1075 = vmatpush.bf16.msra.mxu0 %v898
    %1076 = vmatmul.bf16.gmra.mxu0 %v586
    %v1077 = vpop.f32.mrf.mxu0
    %v1078 = vadd.f32 %v1065, %v1077
    %v1079 = vpop.f32.mrf.mxu0
    %1080 = vdwg.mxu0
    %v1081 = vmul.f32 %v1026, 0.2
    %v1082 = vmul.f32 %v1078, 0.2
    %v1083 = vmax.f32 %v1026, %v1081
    %v1084 = vmax.f32 %v1078, %v1082
    %v1085 = vpack.c.bf16 %v1083, %v1083
    %v1086 = vpack.c.bf16 %v1084, %v1084
    %v1087 = vld [vmem:[#allocation6] sm:$0xf]
    %v1088 = vld [vmem:[#allocation6 + $0x4] sm:$0xf]
    %v1089 = vld [vmem:[#allocation6 + $0x8] sm:$0xf]
    %v1090 = vld [vmem:[#allocation6 + $0xc] sm:$0xf]
    %v1091 = vld [vmem:[#allocation6 + $0x10] sm:$0xf]
    %v1092 = vld [vmem:[#allocation6 + $0x14] sm:$0xf]
    %v1093 = vld [vmem:[#allocation6 + $0x18] sm:$0xf]
    %v1094 = vld [vmem:[#allocation6 + $0x1c] sm:$0xf]
    %v1095 = vld [vmem:[#allocation6 + $0x20] sm:$0xf]
    %v1096 = vld [vmem:[#allocation6 + $0x24] sm:$0xf]
    %v1097 = vld [vmem:[#allocation6 + $0x28] sm:$0xf]
    %v1098 = vld [vmem:[#allocation6 + $0x2c] sm:$0xf]
    %v1099 = vld [vmem:[#allocation6 + $0x30] sm:$0xf]
    %v1100 = vld [vmem:[#allocation6 + $0x34] sm:$0xf]
    %v1101 = vld [vmem:[#allocation6 + $0x38] sm:$0xf]
    %v1102 = vld [vmem:[#allocation6 + $0x3c] sm:$0xf]
    %v1103 = vld [vmem:[#allocation6 + $0x40] sm:$0xf]
    %v1104 = vld [vmem:[#allocation6 + $0x44] sm:$0xf]
    %v1105 = vld [vmem:[#allocation6 + $0x48] sm:$0xf]
    %v1106 = vld [vmem:[#allocation6 + $0x4c] sm:$0xf]
    %v1107 = vld [vmem:[#allocation6 + $0x50] sm:$0xf]
    %v1108 = vld [vmem:[#allocation6 + $0x54] sm:$0xf]
    %v1109 = vld [vmem:[#allocation6 + $0x58] sm:$0xf]
    %v1110 = vld [vmem:[#allocation6 + $0x5c] sm:$0xf]
    %v1111 = vld [vmem:[#allocation6 + $0x60] sm:$0xf]
    %v1112 = vld [vmem:[#allocation6 + $0x64] sm:$0xf]
    %v1113 = vld [vmem:[#allocation6 + $0x68] sm:$0xf]
    %v1114 = vld [vmem:[#allocation6 + $0x6c] sm:$0xf]
    %v1115 = vld [vmem:[#allocation6 + $0x70] sm:$0xf]
    %v1116 = vld [vmem:[#allocation6 + $0x74] sm:$0xf]
    %v1117 = vld [vmem:[#allocation6 + $0x78] sm:$0xf]
    %v1118 = vld [vmem:[#allocation6 + $0x7c] sm:$0xf]
    %v1119 = vld [vmem:[%s6] sm:$0x1]
    %v1121 = vperm.slane %v1119, 0
    %v1155 = vunpack.c.l.b16 %v1087
    %v1156 = vunpack.c.l.b16 %v1088
    %v1157 = vunpack.c.l.b16 %v1089
    %v1158 = vunpack.c.l.b16 %v1090
    %v1159 = vunpack.c.l.b16 %v1091
    %v1160 = vunpack.c.l.b16 %v1092
    %v1161 = vunpack.c.l.b16 %v1093
    %v1162 = vunpack.c.l.b16 %v1094
    %v1163 = vunpack.c.l.b16 %v1095
    %v1164 = vunpack.c.l.b16 %v1096
    %v1165 = vunpack.c.l.b16 %v1097
    %v1166 = vunpack.c.l.b16 %v1098
    %v1167 = vunpack.c.l.b16 %v1099
    %v1168 = vunpack.c.l.b16 %v1100
    %v1169 = vunpack.c.l.b16 %v1101
    %v1170 = vunpack.c.l.b16 %v1102
    %v1171 = vunpack.c.l.b16 %v1103
    %v1172 = vunpack.c.l.b16 %v1104
    %v1173 = vunpack.c.l.b16 %v1105
    %v1174 = vunpack.c.l.b16 %v1106
    %v1175 = vunpack.c.l.b16 %v1107
    %v1176 = vunpack.c.l.b16 %v1108
    %v1177 = vunpack.c.l.b16 %v1109
    %v1178 = vunpack.c.l.b16 %v1110
    %v1179 = vunpack.c.l.b16 %v1111
    %v1180 = vunpack.c.l.b16 %v1112
    %v1181 = vunpack.c.l.b16 %v1113
    %v1182 = vunpack.c.l.b16 %v1114
    %v1183 = vunpack.c.l.b16 %v1115
    %v1184 = vunpack.c.l.b16 %v1116
    %v1185 = vunpack.c.l.b16 %v1117
    %v1186 = vunpack.c.l.b16 %v1118
    %v1187 = vpack.c.b16 %v1156, %v1155
    %v1188 = vpack.c.b16 %v1158, %v1157
    %v1189 = vpack.c.b16 %v1160, %v1159
    %v1190 = vpack.c.b16 %v1162, %v1161
    %v1191 = vpack.c.b16 %v1164, %v1163
    %v1192 = vpack.c.b16 %v1166, %v1165
    %v1193 = vpack.c.b16 %v1168, %v1167
    %v1194 = vpack.c.b16 %v1170, %v1169
    %v1195 = vpack.c.b16 %v1172, %v1171
    %v1196 = vpack.c.b16 %v1174, %v1173
    %v1197 = vpack.c.b16 %v1176, %v1175
    %v1198 = vpack.c.b16 %v1178, %v1177
    %v1199 = vpack.c.b16 %v1180, %v1179
    %v1200 = vpack.c.b16 %v1182, %v1181
    %v1201 = vpack.c.b16 %v1184, %v1183
    %v1202 = vpack.c.b16 %v1186, %v1185
    %1219 = vmatpush.bf16.msra.mxu0 %v1194
    %1220 = vmatpush.bf16.msra.mxu0 %v1193
    %1221 = vmatpush.bf16.msra.mxu0 %v1192
    %1222 = vmatpush.bf16.msra.mxu0 %v1191
    %1223 = vmatpush.bf16.msra.mxu0 %v1190
    %1224 = vmatpush.bf16.msra.mxu0 %v1189
    %1225 = vmatpush.bf16.msra.mxu0 %v1188
    %1226 = vmatpush.bf16.msra.mxu0 %v1187
    %1227 = vmatmul.bf16.gmra.mxu0 %v1085
    %v1228 = vpop.f32.mrf.mxu0
    %v1229 = vadd.f32 %v1121, %v1228
    %v1230 = vpop.f32.mrf.mxu0
    %1231 = vdwg.mxu0
    %1232 = vmatpush.bf16.msra.mxu0 %v1202
    %1233 = vmatpush.bf16.msra.mxu0 %v1201
    %1234 = vmatpush.bf16.msra.mxu0 %v1200
    %1235 = vmatpush.bf16.msra.mxu0 %v1199
    %1236 = vmatpush.bf16.msra.mxu0 %v1198
    %1237 = vmatpush.bf16.msra.mxu0 %v1197
    %1238 = vmatpush.bf16.msra.mxu0 %v1196
    %1239 = vmatpush.bf16.msra.mxu0 %v1195
    %1240 = vmatmul.bf16.gmra.mxu0 %v1086
    %v1241 = vpop.f32.mrf.mxu0
    %v1242 = vadd.f32 %v1229, %v1241
    %v1243 = vpop.f32.mrf.mxu0
    %1244 = vdwg.mxu0
    %v1245 = vxor.u32 %v1242, 2147483648
    %v1246 = vmul.f32 %v1245, 1.442695
    %v1247 = vpow.pop %v1246
    %v1248 = vadd.f32 %v1247, 1.0
    %v1249 = vrcp.pop %v1248
    %v1250 = vmul.f32 %v1248, %v1249
    %v1251 = vsub.f32 1.0, %v1250
    %v1252 = vmul.f32 %v1249, %v1251
    %v1253 = vadd.f32 %v1249, %v1252
    %vm1254 = vweird.f32 %v1248
    %vm1255 = vweird.f32 %v1249
    %vm1256 = vmor %vm1254, %vm1255
    %v1257 = vsel %vm1256, %v1249, %v1253
    %v1258 = vand.u32 2147483647, %v1248
    %vm1259 = vcmp.eq.f32.partialorder %v1258, 8.507059e+37
    %v1260 = vand.u32 %v1248, 2147483648
    %v1261 = vor.u32 1.1754944e-38, %v1260
    %v1262 = vsel %vm1259, %v1261, %v1257
    %v1263 = vmul.f32 1.0, %v1262
    %vm1264 = vcmask 64512
    %1265 = vst.msk [vmem:[%s7] sm:$0xff] %vm1264, %v1263
    // Predicated region
    $region42: #{discriminator_forward.1} parent=1 // pred_check
      _
    $region43: #{discriminator_forward.1} parent=1 // pred_check_branch
      %1267 = sbr.rel (0) target = $region45
    $region44: #{discriminator_forward.1} parent=1 // pred_region
      _
    $region45: #{discriminator_forward.1} parent=1 // pred_fallthru
      _
    // Predicated region
    $region46: #{discriminator_forward.1} parent=1 // pred_check
      _
    $region47: #{discriminator_forward.1} parent=1 // pred_check_branch
      %1269 = sbr.rel (0) target = $region49
    $region48: #{discriminator_forward.1} parent=1 // pred_region
      _
    $region49: #{discriminator_forward.1} parent=1 // pred_fallthru
      _
    %1270 = vsyncpa [#allocation3], 1
    %1271 = vsyncpa [#allocation5], 1

</llo_original>
